<compile_context>
chip_gen: v7x
topology: tpu7x:2x2x1
jax: 0.10.0
libtpu: 0.0.40
codegen_flags: <defaults>
</compile_context>

<pallas_src>
import functools

import numpy as np
import jax
import jax.numpy as jnp
from jax.experimental import pallas as pl
from jax.experimental.pallas import tpu as pltpu

_NEG_BIG = -1e30  # "minus infinity" for padded logit slots (f32 exp -> exactly 0)


def _round_up(x: int, m: int) -> int:
    return ((x + m - 1) // m) * m


def _stub_head_kernel(x_ref, w_ref, b_ref, o_ref, *, widths, exp_in_bf16):
    """Fused linear + per-concept softmax on one batch tile.

    x_ref: [TB, F]       embeddings tile (f32)
    w_ref: [F, n_pad]    packed/padded weight (bf16 or f32; padded cols zero)
    b_ref: [1, n_pad]    packed/padded bias (f32; padded slots are _NEG_BIG)
    o_ref: [TB, n_pad]   output probabilities (lane-dense 2-D store)
    """
    n_pad = o_ref.shape[1]

    x = x_ref[...]
    w = w_ref[...]
    if x.dtype != w.dtype:
        x = x.astype(w.dtype)  # bf16 x bf16 -> f32-accumulate on the MXU
    logits = jnp.dot(x, w, preferred_element_type=jnp.float32) + b_ref[...]

    # Static column ids for segment (per-concept) masking.
    col = jax.lax.broadcasted_iota(jnp.int32, (1, n_pad), 1)

    # Per-concept max, broadcast back to columns (padded cols keep 0;
    # their logits are -1e30 so exp underflows to exactly 0 anyway).
    m_cols = jnp.zeros_like(logits)
    masks = []
    off = 0
    for width in widths:
        mask = (col >= off) & (col < off + width)
        masks.append(mask)
        m_c = jnp.max(jnp.where(mask, logits, _NEG_BIG), axis=-1, keepdims=True)
        m_cols = jnp.where(mask, m_c, m_cols)
        off += width

    z = logits - m_cols
    if exp_in_bf16:
        # Optional EUP throughput bump on v6e/v7x (do NOT enable on v5e).
        e = jnp.exp(z.astype(jnp.bfloat16)).astype(jnp.float32)
    else:
        e = jnp.exp(z)  # one exp pass over the whole [TB, n_pad] tile

    # Per-concept sum + reciprocal (EUP) + one Newton step on tiny [TB, 1].
    inv_cols = jnp.zeros_like(logits)
    for mask in masks:
        s_c = jnp.sum(jnp.where(mask, e, 0.0), axis=-1, keepdims=True)
        inv_c = pl.reciprocal(s_c, approx=True)
        inv_c = inv_c * (2.0 - s_c * inv_c)
        inv_cols = jnp.where(mask, inv_c, inv_cols)

    # Single lane-dense, unmasked store of the full 2-D tile.
    o_ref[...] = (e * inv_cols).astype(o_ref.dtype)


def _prepare_params(weight, bias, n_total, *, lane=128, weight_dtype=None):
    """Pack concepts contiguously; pad once to a lane-aligned total width.

    weight: [F, n_total] (transposed nn.Linear weight), bias: [n_total].
    Padded columns get weight = 0 and bias = _NEG_BIG.
    """
    f = weight.shape[0]
    n_pad = _round_up(max(n_total, 1), lane)
    w_pad = jnp.zeros((f, n_pad), dtype=weight.dtype).at[:, :n_total].set(weight)
    b_pad = jnp.full((1, n_pad), _NEG_BIG, dtype=jnp.float32)
    b_pad = b_pad.at[0, :n_total].set(bias.astype(jnp.float32))
    if weight_dtype is not None:
        w_pad = w_pad.astype(weight_dtype)
    return w_pad, b_pad, n_pad


def stub_head_forward(embeddings, weight, bias, concepts, *,
                      block_b=512, weight_dtype=jnp.bfloat16,
                      out_dtype=jnp.float32, exp_in_bf16=False):
    """Fused StubHead forward: linear -> per-concept softmax.

    embeddings: [B, F]; weight: [F, n_total] (transposed PyTorch Linear
    weight); bias: [n_total]; concepts: ordered dict name -> n_outcomes.
    Returns dict name -> [B, n_outcomes] probabilities (dtype = out_dtype).
    Pass weight_dtype=jnp.float32 for exact f32 module numerics; bf16 weights
    intentionally round the parameters (documented, not bit-exact vs torch).
    """
    b, f = embeddings.shape
    names = list(concepts.keys())
    widths = tuple(int(v) for v in concepts.values())
    assert len(widths) >= 1 and min(widths) >= 1, "every concept needs >= 1 outcome"
    n_total = int(np.sum(widths))
    assert weight.shape == (f, n_total)

    w_pad, b_pad, n_pad = _prepare_params(
        weight, bias, n_total, weight_dtype=weight_dtype)

    # Batch tile: multiple of 8 (f32 sublane).  When B > 8, force >= 2 grid
    # steps so v7x's two TCs both get work; otherwise just one 8-row tile.
    if b > 8:
        tb = min(block_b, _round_up(-(-b // 2), 8))
    else:
        tb = 8
    tb = max(8, _round_up(tb, 8))
    b_padded = _round_up(b, tb)
    x = embeddings
    if b_padded != b:
        x = jnp.pad(x, ((0, b_padded - b), (0, 0)))
    grid = (b_padded // tb,)

    # Explicit VMEM budget (v7x: 64 MiB physical, 32 MiB default scoped).
    bytes_of = lambda d: jnp.dtype(d).itemsize
    vmem_est = (
        2 * tb * f * bytes_of(x.dtype)                      # double-buffered x
        + 2 * w_pad.size * bytes_of(w_pad.dtype)            # resident weight (x2 safety)
        + 2 * b_pad.size * 4                                 # resident bias
        + 2 * tb * n_pad * bytes_of(out_dtype)               # double-buffered out
        + 8 * tb * n_pad * 4                                 # f32 temporaries
    )
    vmem_limit = int(min(max(2 * vmem_est, 32 * 1024 * 1024), 64 * 1024 * 1024))

    cost = pl.CostEstimate(
        flops=2 * b_padded * f * n_pad,
        transcendentals=b_padded * n_pad + b_padded * len(widths),
        bytes_accessed=int(
            x.size * bytes_of(x.dtype)
            + w_pad.size * bytes_of(w_pad.dtype)
            + b_pad.size * 4
            + b_padded * n_pad * bytes_of(out_dtype)),
    )

    probs = pl.pallas_call(
        functools.partial(_stub_head_kernel, widths=widths,
                          exp_in_bf16=exp_in_bf16),
        out_shape=jax.ShapeDtypeStruct((b_padded, n_pad), out_dtype),
        grid_spec=pltpu.PrefetchScalarGridSpec(
            num_scalar_prefetch=0,
            grid=grid,
            in_specs=[
                pl.BlockSpec((tb, f), lambda i: (i, 0)),     # x walks the batch
                pl.BlockSpec((f, n_pad), lambda i: (0, 0)),  # weight resident
                pl.BlockSpec((1, n_pad), lambda i: (0, 0)),  # bias resident
            ],
            out_specs=pl.BlockSpec((tb, n_pad), lambda i: (i, 0)),
        ),
        compiler_params=pltpu.CompilerParams(
            dimension_semantics=("parallel",),
            vmem_limit_bytes=vmem_limit),
        cost_estimate=cost,
    )(x, w_pad, b_pad)

    # Glue: drop batch padding, slice the packed columns per concept.
    probs = probs[:b]
    out = {}
    off = 0
    for name, width in zip(names, widths):
        out[name] = probs[:, off:off + width]
        off += width
    return out


def _reference(embeddings, weight, bias, concepts, weight_dtype):
    """Pure-JAX reference using the same (possibly bf16-rounded) operands."""
    if jnp.dtype(weight_dtype) == jnp.dtype(jnp.float32):
        logits = embeddings @ weight + bias
    else:
        logits = (embeddings.astype(weight_dtype).astype(jnp.float32)
                  @ weight.astype(weight_dtype).astype(jnp.float32)) + bias
    out = {}
    off = 0
    for name, width in concepts.items():
        out[name] = jax.nn.softmax(logits[:, off:off + width], axis=1)
        off += width
    return out


if __name__ == "__main__":
    # Small, deterministic setup consistent with the module's __init__.
    in_features = 32
    concepts = {"shape": 3, "color": 5, "size": 4}   # n_total_outcomes = 12

    key = jax.random.PRNGKey(0)
    k_x, k_w, k_b, k_x2 = jax.random.split(key, 4)

    n_total = sum(concepts.values())
    # nn.Linear weight is [out, in]; store transposed [in, out] for the kernel.
    weight = 0.1 * jax.random.normal(k_w, (in_features, n_total), dtype=jnp.float32)
    bias = 0.1 * jax.random.normal(k_b, (n_total,), dtype=jnp.float32)

    ok = True

    # --- check 1: tiny batch, exact f32 parameter path -----------------------
    batch = 2
    embeddings = jax.random.normal(k_x, (batch, in_features), dtype=jnp.float32)
    out = stub_head_forward(embeddings, weight, bias, concepts,
                            weight_dtype=jnp.float32)
    out = jax.block_until_ready(out)
    ref = _reference(embeddings, weight, bias, concepts, jnp.float32)
    for name, width in concepts.items():
        ok &= out[name].shape == (batch, width)
        ok &= bool(jnp.allclose(out[name], ref[name], atol=1e-4, rtol=1e-4))
        ok &= bool(jnp.allclose(out[name].sum(axis=1), 1.0, atol=1e-4))

    # --- check 2: multi-step batch grid, bf16 fast path ----------------------
    batch2 = 20
    embeddings2 = jax.random.normal(k_x2, (batch2, in_features), dtype=jnp.float32)
    out2 = stub_head_forward(embeddings2, weight, bias, concepts,
                             block_b=8, weight_dtype=jnp.bfloat16)
    out2 = jax.block_until_ready(out2)
    ref2 = _reference(embeddings2, weight, bias, concepts, jnp.bfloat16)
    for name, width in concepts.items():
        ok &= out2[name].shape == (batch2, width)
        ok &= bool(jnp.allclose(out2[name], ref2[name], atol=2e-4, rtol=2e-4))
        ok &= bool(jnp.allclose(out2[name].sum(axis=1), 1.0, atol=1e-3))

    if ok:
        print("KERNEL_OK")
    else:
        print("MISMATCH")
</pallas_src>

<mosaic_0001>
module attributes {stable_mosaic.version = 11 : i64} {
  func.func @_stub_head_kernel(%arg0: i32, %arg1: memref<8x32xf32, #tpu.memory_space<vmem>>, %arg2: memref<32x128xf32, #tpu.memory_space<vmem>>, %arg3: memref<1x128xf32, #tpu.memory_space<vmem>>, %arg4: memref<8x128xf32, #tpu.memory_space<vmem>>) attributes {dimension_semantics = [#tpu.dimension_semantics<parallel>], iteration_bounds = array<i64: 1>, scalar_prefetch = 0 : i64, scratch_operands = 0 : i64, tpu.core_type = #tpu.core_type<tc>, window_params = [{transform_indices = @transform_0, window_bounds = array<i64: 8, 32>}, {pipeline_mode = #tpu.pipeline_mode<synchronous>, transform_indices = @transform_1, window_bounds = array<i64: 32, 128>}, {pipeline_mode = #tpu.pipeline_mode<synchronous>, transform_indices = @transform_2, window_bounds = array<i64: 1, 128>}, {transform_indices = @transform_3, window_bounds = array<i64: 8, 128>}]} {
    %c0 = arith.constant 0 : index
    %c0_0 = arith.constant 0 : index
    %0 = vector.load %arg1[%c0, %c0_0] : memref<8x32xf32, #tpu.memory_space<vmem>>, vector<8x32xf32>
    %c0_1 = arith.constant 0 : index
    %c0_2 = arith.constant 0 : index
    %1 = vector.load %arg2[%c0_1, %c0_2] : memref<32x128xf32, #tpu.memory_space<vmem>>, vector<32x128xf32>
    %cst = arith.constant dense<0.000000e+00> : vector<8x128xf32>
    %2 = tpu.matmul %0, %1, %cst {dimension_numbers = #tpu.dot_dimension_numbers<[1], [0], [0], [1], [0, 0, 1, 1], [], []>} : vector<8x32xf32>, vector<32x128xf32>, vector<8x128xf32> -> vector<8x128xf32>
    %c0_3 = arith.constant 0 : index
    %c0_4 = arith.constant 0 : index
    %3 = vector.load %arg3[%c0_3, %c0_4] : memref<1x128xf32, #tpu.memory_space<vmem>>, vector<1x128xf32>
    %4 = vector.broadcast %3 : vector<1x128xf32> to vector<8x128xf32>
    %5 = arith.addf %2, %4 : vector<8x128xf32>
    %6 = tpu.iota {dimensions = array<i32: 1>} : vector<1x128xi32>
    %cst_5 = arith.constant 0.000000e+00 : f32
    %7 = vector.broadcast %cst_5 : f32 to vector<8x128xf32>
    %c0_i32 = arith.constant 0 : i32
    %8 = vector.broadcast %c0_i32 : i32 to vector<1x128xi32>
    %9 = arith.cmpi sge, %6, %8 : vector<1x128xi32>
    %c3_i32 = arith.constant 3 : i32
    %10 = vector.broadcast %c3_i32 : i32 to vector<1x128xi32>
    %11 = arith.cmpi slt, %6, %10 : vector<1x128xi32>
    %12 = arith.andi %9, %11 : vector<1x128xi1>
    %cst_6 = arith.constant -1.000000e+30 : f32
    %13 = vector.shape_cast %12 : vector<1x128xi1> to vector<1x128xi1>
    %14 = vector.broadcast %13 : vector<1x128xi1> to vector<8x128xi1>
    %15 = vector.broadcast %cst_6 : f32 to vector<8x128xf32>
    %16 = arith.select %14, %5, %15 : vector<8x128xi1>, vector<8x128xf32>
    %cst_7 = arith.constant dense<0xFF800000> : vector<8xf32>
    %17 = vector.multi_reduction <maximumf>, %16, %cst_7 [1] : vector<8x128xf32> to vector<8xf32>
    %18 = vector.shape_cast %17 : vector<8xf32> to vector<8x1xf32>
    %19 = vector.shape_cast %12 : vector<1x128xi1> to vector<1x128xi1>
    %20 = vector.broadcast %19 : vector<1x128xi1> to vector<8x128xi1>
    %21 = vector.shape_cast %18 : vector<8x1xf32> to vector<8x1xf32>
    %22 = vector.broadcast %21 : vector<8x1xf32> to vector<8x128xf32>
    %23 = arith.select %20, %22, %7 : vector<8x128xi1>, vector<8x128xf32>
    %c3_i32_8 = arith.constant 3 : i32
    %24 = vector.broadcast %c3_i32_8 : i32 to vector<1x128xi32>
    %25 = arith.cmpi sge, %6, %24 : vector<1x128xi32>
    %c8_i32 = arith.constant 8 : i32
    %26 = vector.broadcast %c8_i32 : i32 to vector<1x128xi32>
    %27 = arith.cmpi slt, %6, %26 : vector<1x128xi32>
    %28 = arith.andi %25, %27 : vector<1x128xi1>
    %cst_9 = arith.constant -1.000000e+30 : f32
    %29 = vector.shape_cast %28 : vector<1x128xi1> to vector<1x128xi1>
    %30 = vector.broadcast %29 : vector<1x128xi1> to vector<8x128xi1>
    %31 = vector.broadcast %cst_9 : f32 to vector<8x128xf32>
    %32 = arith.select %30, %5, %31 : vector<8x128xi1>, vector<8x128xf32>
    %cst_10 = arith.constant dense<0xFF800000> : vector<8xf32>
    %33 = vector.multi_reduction <maximumf>, %32, %cst_10 [1] : vector<8x128xf32> to vector<8xf32>
    %34 = vector.shape_cast %33 : vector<8xf32> to vector<8x1xf32>
    %35 = vector.shape_cast %28 : vector<1x128xi1> to vector<1x128xi1>
    %36 = vector.broadcast %35 : vector<1x128xi1> to vector<8x128xi1>
    %37 = vector.shape_cast %34 : vector<8x1xf32> to vector<8x1xf32>
    %38 = vector.broadcast %37 : vector<8x1xf32> to vector<8x128xf32>
    %39 = arith.select %36, %38, %23 : vector<8x128xi1>, vector<8x128xf32>
    %c8_i32_11 = arith.constant 8 : i32
    %40 = vector.broadcast %c8_i32_11 : i32 to vector<1x128xi32>
    %41 = arith.cmpi sge, %6, %40 : vector<1x128xi32>
    %c12_i32 = arith.constant 12 : i32
    %42 = vector.broadcast %c12_i32 : i32 to vector<1x128xi32>
    %43 = arith.cmpi slt, %6, %42 : vector<1x128xi32>
    %44 = arith.andi %41, %43 : vector<1x128xi1>
    %cst_12 = arith.constant -1.000000e+30 : f32
    %45 = vector.shape_cast %44 : vector<1x128xi1> to vector<1x128xi1>
    %46 = vector.broadcast %45 : vector<1x128xi1> to vector<8x128xi1>
    %47 = vector.broadcast %cst_12 : f32 to vector<8x128xf32>
    %48 = arith.select %46, %5, %47 : vector<8x128xi1>, vector<8x128xf32>
    %cst_13 = arith.constant dense<0xFF800000> : vector<8xf32>
    %49 = vector.multi_reduction <maximumf>, %48, %cst_13 [1] : vector<8x128xf32> to vector<8xf32>
    %50 = vector.shape_cast %49 : vector<8xf32> to vector<8x1xf32>
    %51 = vector.shape_cast %44 : vector<1x128xi1> to vector<1x128xi1>
    %52 = vector.broadcast %51 : vector<1x128xi1> to vector<8x128xi1>
    %53 = vector.shape_cast %50 : vector<8x1xf32> to vector<8x1xf32>
    %54 = vector.broadcast %53 : vector<8x1xf32> to vector<8x128xf32>
    %55 = arith.select %52, %54, %39 : vector<8x128xi1>, vector<8x128xf32>
    %56 = arith.subf %5, %55 : vector<8x128xf32>
    %57 = math.exp %56 : vector<8x128xf32>
    %cst_14 = arith.constant 0.000000e+00 : f32
    %58 = vector.broadcast %cst_14 : f32 to vector<8x128xf32>
    %cst_15 = arith.constant 0.000000e+00 : f32
    %59 = vector.shape_cast %12 : vector<1x128xi1> to vector<1x128xi1>
    %60 = vector.broadcast %59 : vector<1x128xi1> to vector<8x128xi1>
    %61 = vector.broadcast %cst_15 : f32 to vector<8x128xf32>
    %62 = arith.select %60, %57, %61 : vector<8x128xi1>, vector<8x128xf32>
    %cst_16 = arith.constant dense<0.000000e+00> : vector<8xf32>
    %63 = vector.multi_reduction <add>, %62, %cst_16 [1] : vector<8x128xf32> to vector<8xf32>
    %64 = vector.shape_cast %63 : vector<8xf32> to vector<8x1xf32>
    %65 = tpu.reciprocal %64 {approx = true} : vector<8x1xf32> -> vector<8x1xf32>
    %66 = arith.mulf %64, %65 : vector<8x1xf32>
    %cst_17 = arith.constant 2.000000e+00 : f32
    %67 = vector.broadcast %cst_17 : f32 to vector<8x1xf32>
    %68 = arith.subf %67, %66 : vector<8x1xf32>
    %69 = arith.mulf %65, %68 : vector<8x1xf32>
    %70 = vector.shape_cast %12 : vector<1x128xi1> to vector<1x128xi1>
    %71 = vector.broadcast %70 : vector<1x128xi1> to vector<8x128xi1>
    %72 = vector.shape_cast %69 : vector<8x1xf32> to vector<8x1xf32>
    %73 = vector.broadcast %72 : vector<8x1xf32> to vector<8x128xf32>
    %74 = arith.select %71, %73, %58 : vector<8x128xi1>, vector<8x128xf32>
    %cst_18 = arith.constant 0.000000e+00 : f32
    %75 = vector.shape_cast %28 : vector<1x128xi1> to vector<1x128xi1>
    %76 = vector.broadcast %75 : vector<1x128xi1> to vector<8x128xi1>
    %77 = vector.broadcast %cst_18 : f32 to vector<8x128xf32>
    %78 = arith.select %76, %57, %77 : vector<8x128xi1>, vector<8x128xf32>
    %cst_19 = arith.constant dense<0.000000e+00> : vector<8xf32>
    %79 = vector.multi_reduction <add>, %78, %cst_19 [1] : vector<8x128xf32> to vector<8xf32>
    %80 = vector.shape_cast %79 : vector<8xf32> to vector<8x1xf32>
    %81 = tpu.reciprocal %80 {approx = true} : vector<8x1xf32> -> vector<8x1xf32>
    %82 = arith.mulf %80, %81 : vector<8x1xf32>
    %cst_20 = arith.constant 2.000000e+00 : f32
    %83 = vector.broadcast %cst_20 : f32 to vector<8x1xf32>
    %84 = arith.subf %83, %82 : vector<8x1xf32>
    %85 = arith.mulf %81, %84 : vector<8x1xf32>
    %86 = vector.shape_cast %28 : vector<1x128xi1> to vector<1x128xi1>
    %87 = vector.broadcast %86 : vector<1x128xi1> to vector<8x128xi1>
    %88 = vector.shape_cast %85 : vector<8x1xf32> to vector<8x1xf32>
    %89 = vector.broadcast %88 : vector<8x1xf32> to vector<8x128xf32>
    %90 = arith.select %87, %89, %74 : vector<8x128xi1>, vector<8x128xf32>
    %cst_21 = arith.constant 0.000000e+00 : f32
    %91 = vector.shape_cast %44 : vector<1x128xi1> to vector<1x128xi1>
    %92 = vector.broadcast %91 : vector<1x128xi1> to vector<8x128xi1>
    %93 = vector.broadcast %cst_21 : f32 to vector<8x128xf32>
    %94 = arith.select %92, %57, %93 : vector<8x128xi1>, vector<8x128xf32>
    %cst_22 = arith.constant dense<0.000000e+00> : vector<8xf32>
    %95 = vector.multi_reduction <add>, %94, %cst_22 [1] : vector<8x128xf32> to vector<8xf32>
    %96 = vector.shape_cast %95 : vector<8xf32> to vector<8x1xf32>
    %97 = tpu.reciprocal %96 {approx = true} : vector<8x1xf32> -> vector<8x1xf32>
    %98 = arith.mulf %96, %97 : vector<8x1xf32>
    %cst_23 = arith.constant 2.000000e+00 : f32
    %99 = vector.broadcast %cst_23 : f32 to vector<8x1xf32>
    %100 = arith.subf %99, %98 : vector<8x1xf32>
    %101 = arith.mulf %97, %100 : vector<8x1xf32>
    %102 = vector.shape_cast %44 : vector<1x128xi1> to vector<1x128xi1>
    %103 = vector.broadcast %102 : vector<1x128xi1> to vector<8x128xi1>
    %104 = vector.shape_cast %101 : vector<8x1xf32> to vector<8x1xf32>
    %105 = vector.broadcast %104 : vector<8x1xf32> to vector<8x128xf32>
    %106 = arith.select %103, %105, %90 : vector<8x128xi1>, vector<8x128xf32>
    %107 = arith.mulf %57, %106 : vector<8x128xf32>
    %c0_24 = arith.constant 0 : index
    %c0_25 = arith.constant 0 : index
    %108 = vector.load %arg4[%c0_24, %c0_25] : memref<8x128xf32, #tpu.memory_space<vmem>>, vector<8x128xf32>
    tpu.vector_store %arg4[%c0_24, %c0_25], %107 {strides = array<i32>} : memref<8x128xf32, #tpu.memory_space<vmem>>, vector<8x128xf32>,
    return
  }
  func.func @transform_0(%arg0: i32) -> (i32, i32) {
    %c0_i32 = arith.constant 0 : i32
    %c0_i32_0 = arith.constant 0 : i32
    return %arg0, %c0_i32 : i32, i32
  }
  func.func @transform_1(%arg0: i32) -> (i32, i32) {
    %c0_i32 = arith.constant 0 : i32
    %c0_i32_0 = arith.constant 0 : i32
    %c0_i32_1 = arith.constant 0 : i32
    return %c0_i32, %c0_i32_0 : i32, i32
  }
  func.func @transform_2(%arg0: i32) -> (i32, i32) {
    %c0_i32 = arith.constant 0 : i32
    %c0_i32_0 = arith.constant 0 : i32
    %c0_i32_1 = arith.constant 0 : i32
    return %c0_i32, %c0_i32_0 : i32, i32
  }
  func.func @transform_3(%arg0: i32) -> (i32, i32) {
    %c0_i32 = arith.constant 0 : i32
    %c0_i32_0 = arith.constant 0 : i32
    return %arg0, %c0_i32 : i32, i32
  }
}

</mosaic_0001>

<llo_original>
// kernel: tpu_custom_call.1
$region0: #{tpu_custom_call.1}
  #allocation0 [shape = 'u32[]', space=smem, size = 0x4, offset = 0x4, fixed_abs, tag = 'smem constant byte address 0x4 - core index']
  #allocation1 [shape = 'u32[144,128]{1,0:T(1,128)}', space=vmem, size = 0x12000, scoped, tag = 'internal scratch']
  %s0 = inlined_call_operand.hbm [shape: f32[8,32], index: 0, kind: input, shape index: {}]
  %s1 = inlined_call_operand.hbm [shape: f32[32,128], index: 1, kind: input, shape index: {}]
  %s2 = inlined_call_operand.vmem [shape: f32[1,128], index: 2, kind: input, shape index: {}]
  %s3 = inlined_call_operand.hbm [shape: f32[8,128], index: 3, kind: output, shape index: {}]
  %s4 = sld [smem:[#allocation0]]
  $region30: #{tpu_custom_call.1} parent=0
    _
  %s6 = ssub.s32 1, %s4
  %s7 = scalar_select 0, %s6, %s4
  $region1: #{tpu_custom_call.1} parent=0
    #allocation2 [shape = 'u8[4096]{0}', space=vmem, size = 0x1000, scoped, tag = 'input window, operand 0, single buffered']
    #allocation3 [shape = 's32[1]{0}', space=sflag, size = 0x4, scoped, tag = 'scoped memory for tpu_custom_call.1']
    #allocation4 [shape = 's32[1]{0}', space=sflag, size = 0x4, scoped, tag = 'scoped memory for tpu_custom_call.1']
    #allocation5 [shape = 'u8[16384]{0}', space=vmem, size = 0x4000, scoped, tag = 'input window, operand 1, single buffered']
    #allocation6 [shape = 's32[1]{0}', space=sflag, size = 0x4, scoped, tag = 'scoped memory for tpu_custom_call.1']
    #allocation7 [shape = 'u8[4096]{0}', space=vmem, size = 0x1000, scoped, tag = 'output window, operand 0, single buffered']
    %8 = vsyncpa [#allocation3], 0
    %9 = vsyncpa [#allocation6], 0
    %10 = vsyncpa [#allocation4], 0
    // Predicated region
    $region2: #{tpu_custom_call.1} parent=1 // pred_check
      _
    $region3: #{tpu_custom_call.1} parent=1 // pred_check_branch
      %12 = sbr.rel (0) target = $region5
    $region4: #{tpu_custom_call.1} parent=1 // pred_region
      %s14 = ssub.s32 128, 128
      %15 = vsyncadd [#allocation3], %s14
      %s17 = sshll.u32 [#allocation2], 4
      %s18 = int_to_ptr.vmem [resolvable:$true] %s17
      %20 = dma.hbm_to_vmem [thread:$0]  %s0, 128, %s18, [#allocation3]
    $region5: #{tpu_custom_call.1} parent=1 // pred_fallthru
      _
    // Predicated region
    $region6: #{tpu_custom_call.1} parent=1 // pred_check
      _
    $region7: #{tpu_custom_call.1} parent=1 // pred_check_branch
      %22 = sbr.rel (0) target = $region9
    $region8: #{tpu_custom_call.1} parent=1 // pred_region
      %s24 = ssub.s32 512, 512
      %25 = vsyncadd [#allocation6], %s24
      %s26 = sshll.u32 [#allocation5], 4
      %s27 = int_to_ptr.vmem [resolvable:$true] %s26
      %32 = dma.hbm_to_vmem [thread:$0]  %s1, 512, %s27, [#allocation6], 128, 128, 8
    $region9: #{tpu_custom_call.1} parent=1 // pred_fallthru
      _
    // Predicated region
    $region10: #{tpu_custom_call.1} parent=1 // pred_check
      _
    $region11: #{tpu_custom_call.1} parent=1 // pred_check_branch
      %34 = sbr.rel (0) target = $region13
    $region12: #{tpu_custom_call.1} parent=1 // pred_region
      _
    $region13: #{tpu_custom_call.1} parent=1 // pred_fallthru
      _
    // Predicated region
    $region14: #{tpu_custom_call.1} parent=1 // pred_check
      _
    $region15: #{tpu_custom_call.1} parent=1 // pred_check_branch
      %36 = sbr.rel (0) target = $region17
    $region16: #{tpu_custom_call.1} parent=1 // pred_region
      %37 = dma.done [#allocation3], 128
    $region17: #{tpu_custom_call.1} parent=1 // pred_fallthru
      _
    // Predicated region
    $region18: #{tpu_custom_call.1} parent=1 // pred_check
      _
    $region19: #{tpu_custom_call.1} parent=1 // pred_check_branch
      %39 = sbr.rel (0) target = $region21
    $region20: #{tpu_custom_call.1} parent=1 // pred_region
      %40 = dma.done [#allocation6], 512
    $region21: #{tpu_custom_call.1} parent=1 // pred_fallthru
      _
    %v41 = vld [vmem:[#allocation2] sm:$0xff]
    %v42 = vld [vmem:[#allocation5] sm:$0xff]
    %v43 = vld [vmem:[#allocation5 + $0x8] sm:$0xff]
    %v44 = vld [vmem:[#allocation5 + $0x10] sm:$0xff]
    %v45 = vld [vmem:[#allocation5 + $0x18] sm:$0xff]
    %v46 = vld [vmem:[%s2] sm:$0x1]
    %v48 = vlaneseq
    %v49 = vshrl.u32 %v48, 7
    %v50 = vsub.s32 0, %v49
    %v51 = vrot.slane %v46, %v50
    %vm53 = vcmask 261120
    %v55 = vsel %vm53, %v41, 0
    %57 = vmatprep.subr.mxu0 0.0
    %58 = vmatpush1.msra.mxu0 %v42
    %59 = vmatprep.subr.mxu0 0.0
    %60 = vmatpush1.msra.mxu0 %v43
    %61 = vmatprep.subr.mxu0 0.0
    %62 = vmatpush1.msra.mxu0 %v44
    %63 = vmatprep.subr.mxu0 0.0
    %64 = vmatpush1.msra.mxu0 %v45
    %65 = vmatprep.subr.mxu0 0.0
    %66 = vmatpush1.msra.mxu0 0.0
    %67 = vmatprep.subr.mxu0 0.0
    %68 = vmatpush1.msra.mxu0 0.0
    %69 = vmatprep.subr.mxu0 0.0
    %70 = vmatpush1.msra.mxu0 0.0
    %71 = vmatprep.subr.mxu0 0.0
    %72 = vmatpush1.msra.mxu0 0.0
    %73 = vmatprep.subr.mxu0 0.0
    %74 = vmatpush1.msra.mxu0 0.0
    %75 = vmatprep.subr.mxu0 0.0
    %76 = vmatpush1.msra.mxu0 0.0
    %77 = vmatprep.subr.mxu0 0.0
    %78 = vmatpush1.msra.mxu0 0.0
    %79 = vmatprep.subr.mxu0 0.0
    %80 = vmatpush1.msra.mxu0 0.0
    %81 = vmatprep.subr.mxu0 0.0
    %82 = vmatpush1.msra.mxu0 0.0
    %83 = vmatprep.subr.mxu0 0.0
    %84 = vmatpush1.msra.mxu0 0.0
    %85 = vmatprep.subr.mxu0 0.0
    %86 = vmatpush1.msra.mxu0 0.0
    %87 = vmatprep.subr.mxu0 0.0
    %88 = vmatpush1.msra.mxu0 0.0
    %89 = vmatprep.subr.mxu0 0.0
    %90 = vmatpush1.msra.mxu0 0.0
    %91 = vmatprep.subr.mxu0 0.0
    %92 = vmatpush1.msra.mxu0 0.0
    %93 = vmatprep.subr.mxu0 0.0
    %94 = vmatpush1.msra.mxu0 0.0
    %95 = vmatprep.subr.mxu0 0.0
    %96 = vmatpush1.msra.mxu0 0.0
    %97 = vmatprep.subr.mxu0 0.0
    %98 = vmatpush1.msra.mxu0 0.0
    %99 = vmatprep.subr.mxu0 0.0
    %100 = vmatpush1.msra.mxu0 0.0
    %101 = vmatprep.subr.mxu0 0.0
    %102 = vmatpush1.msra.mxu0 0.0
    %103 = vmatprep.subr.mxu0 0.0
    %104 = vmatpush1.msra.mxu0 0.0
    %105 = vmatprep.subr.mxu0 0.0
    %106 = vmatpush1.msra.mxu0 0.0
    %107 = vmatprep.subr.mxu0 0.0
    %108 = vmatpush1.msra.mxu0 0.0
    %109 = vmatprep.subr.mxu0 0.0
    %110 = vmatpush1.msra.mxu0 0.0
    %111 = vmatprep.subr.mxu0 0.0
    %112 = vmatpush1.msra.mxu0 0.0
    %113 = vmatprep.subr.mxu0 0.0
    %114 = vmatpush1.msra.mxu0 0.0
    %115 = vmatprep.subr.mxu0 0.0
    %116 = vmatpush1.msra.mxu0 0.0
    %117 = vmatprep.subr.mxu0 0.0
    %118 = vmatpush1.msra.mxu0 0.0
    %119 = vmatprep.subr.mxu0 0.0
    %120 = vmatpush1.msra.mxu0 0.0
    %121 = vmatprep.mubr.f32.mxu0 0.0
    %122 = vmatmul.mubr.f32.gmra.mrb[0].mxu0 %v55
    %v123 = vpop.f32.mrb[0].mxu0
    %v124 = vadd.f32 %v51, %v123
    %v125 = vpop.f32.mrb[0].mxu0
    %126 = vdwg.mxu0
    %v127 = vlaneseq
    %v128 = vand.u32 %v127, 127
    %vm129 = vcmp.ge.s32.totalorder %v128, 0
    %vm130 = vcmp.lt.s32.totalorder %v128, 3
    %vm131 = vmand %vm129, %vm130
    %v132 = vsel %vm131, 1, 0
    %vm133 = vcmp.eq.s32.totalorder %v132, 1
    %v134 = vsel %vm133, %v124, -1e+30
    %135 = vmax.xlane.f32.xlu0 %v134
    %v136 = vpop.xlane.xlu0 %135
    %v137 = vsel %vm133, %v136, 0.0
    %vm138 = vcmp.ge.s32.totalorder %v128, 3
    %vm139 = vcmp.lt.s32.totalorder %v128, 8
    %vm140 = vmand %vm138, %vm139
    %v141 = vsel %vm140, 1, 0
    %vm142 = vcmp.eq.s32.totalorder %v141, 1
    %v143 = vsel %vm142, %v124, -1e+30
    %144 = vmax.xlane.f32.xlu0 %v143
    %v145 = vpop.xlane.xlu0 %144
    %v146 = vsel %vm142, %v145, %v137
    %vm147 = vcmp.ge.s32.totalorder %v128, 8
    %vm148 = vcmp.lt.s32.totalorder %v128, 12
    %vm149 = vmand %vm147, %vm148
    %v150 = vsel %vm149, 1, 0
    %vm151 = vcmp.eq.s32.totalorder %v150, 1
    %v152 = vsel %vm151, %v124, -1e+30
    %153 = vmax.xlane.f32.xlu0 %v152
    %v154 = vpop.xlane.xlu0 %153
    %v155 = vsel %vm151, %v154, %v146
    %v156 = vsub.f32 %v124, %v155
    %v157 = vmul.f32 %v156, 1.442695
    %v158 = vpow.pop %v157
    %v159 = vsel %vm133, %v158, 0.0
    %160 = vadd.xlane.f32.xlu0 %v159
    %v161 = vpop.xlane.xlu0 %160
    %v162 = vrcp.pop %v161
    %v163 = vmul.f32 %v161, %v162
    %v164 = vsub.f32 2.0, %v163
    %v165 = vmul.f32 %v162, %v164
    %v166 = vsel %vm133, %v165, 0.0
    %v167 = vsel %vm142, %v158, 0.0
    %168 = vadd.xlane.f32.xlu0 %v167
    %v169 = vpop.xlane.xlu0 %168
    %v170 = vrcp.pop %v169
    %v171 = vmul.f32 %v169, %v170
    %v172 = vsub.f32 2.0, %v171
    %v173 = vmul.f32 %v170, %v172
    %v174 = vsel %vm142, %v173, %v166
    %v175 = vsel %vm151, %v158, 0.0
    %176 = vadd.xlane.f32.xlu0 %v175
    %v177 = vpop.xlane.xlu0 %176
    %v178 = vrcp.pop %v177
    %v179 = vmul.f32 %v177, %v178
    %v180 = vsub.f32 2.0, %v179
    %v181 = vmul.f32 %v178, %v180
    %v182 = vsel %vm151, %v181, %v174
    %v183 = vmul.f32 %v158, %v182
    %184 = vst [vmem:[#allocation7] sm:$0xff] %v183
    // Predicated region
    $region22: #{tpu_custom_call.1} parent=1 // pred_check
      _
    $region23: #{tpu_custom_call.1} parent=1 // pred_check_branch
      %186 = sbr.rel (0) target = $region25
    $region24: #{tpu_custom_call.1} parent=1 // pred_region
      %s188 = ssub.s32 128, 128
      %189 = vsyncadd [#allocation4], %s188
      %s191 = sshll.u32 [#allocation7], 4
      %s192 = int_to_ptr.vmem [resolvable:$true] %s191
      %194 = dma.vmem_to_hbm [thread:$0]  %s192, 128, %s3, [#allocation4]
    $region25: #{tpu_custom_call.1} parent=1 // pred_fallthru
      _
    // Predicated region
    $region26: #{tpu_custom_call.1} parent=1 // pred_check
      _
    $region27: #{tpu_custom_call.1} parent=1 // pred_check_branch
      %196 = sbr.rel (0) target = $region29
    $region28: #{tpu_custom_call.1} parent=1 // pred_region
      %197 = dma.done [#allocation4], 128
    $region29: #{tpu_custom_call.1} parent=1 // pred_fallthru
      _
    %198 = vsyncpa [#allocation3], 1
    %199 = vsyncpa [#allocation6], 1
    %200 = vsyncpa [#allocation4], 1

</llo_original>
